<compile_context>
chip_gen: v6e
topology: v6e:2x2x1
jax: 0.10.0
libtpu: 0.0.40
codegen_flags: <defaults>
</compile_context>

<pallas_src>
import jax
import jax.numpy as jnp
from jax.experimental import pallas as pl
from jax.experimental.pallas import tpu as pltpu

_LANE = 128
_SUBLANE = 8


def classifier_kernel(x_ref, w_ref, b_ref, o_ref):
    # x_ref: (TB, K)  w_ref: (C_pad, K)  b_ref: (1, C_pad)  o_ref: (TB, C_pad)
    # Contract on the weight's last dim (K stays on the lane axis for the
    # resident weight tile); MXU matmul with f32 accumulation.
    logits = jax.lax.dot_general(
        x_ref[...], w_ref[...],
        dimension_numbers=(((1,), (1,)), ((), ())),
        preferred_element_type=jnp.float32,
    )
    logits = logits + b_ref[...].astype(jnp.float32)   # (1, C_pad) -> (TB, C_pad)
    o_ref[...] = jax.nn.sigmoid(logits).astype(o_ref.dtype)


def classifier_forward(x, weight, bias, *, block_b=512,
                       vmem_limit_bytes=32 * 1024 * 1024):
    """x: (B, *) with prod(*) == 2048; weight: (num_class, 2048); bias: (num_class,)."""
    B = x.shape[0]
    x2d = x.reshape(B, -1)                      # == torch x.view(B, -1)
    K = x2d.shape[1]
    C = weight.shape[0]
    assert weight.shape == (C, K)
    assert bias.shape == (C,)

    # --- pad class dim to a lane-dense multiple of 128 -----------------------
    C_pad = ((C + _LANE - 1) // _LANE) * _LANE
    if C_pad != C:
        weight_p = jnp.zeros((C_pad, K), weight.dtype).at[:C, :].set(weight)
        bias_p = jnp.zeros((C_pad,), bias.dtype).at[:C].set(bias)
    else:
        weight_p, bias_p = weight, bias
    b2d = bias_p.reshape(1, C_pad)

    # --- batch tiling: tile must be a multiple of 8 (sublane) -----------------
    tb = min(block_b, ((B + _SUBLANE - 1) // _SUBLANE) * _SUBLANE)
    tb = max(tb, _SUBLANE)
    B_pad = pl.cdiv(B, tb) * tb
    if B_pad != B:
        x2d = jnp.pad(x2d, ((0, B_pad - B), (0, 0)))
    grid = (B_pad // tb,)

    itemsize = x2d.dtype.itemsize
    cost = pl.CostEstimate(
        flops=2 * B_pad * K * C_pad,
        transcendentals=B_pad * C_pad,
        bytes_accessed=(B_pad * K * itemsize            # x read
                        + C_pad * K * weight_p.dtype.itemsize
                        + C_pad * b2d.dtype.itemsize
                        + B_pad * C_pad * itemsize),    # out write
    )

    out = pl.pallas_call(
        classifier_kernel,
        out_shape=jax.ShapeDtypeStruct((B_pad, C_pad), x2d.dtype),
        grid_spec=pltpu.PrefetchScalarGridSpec(
            num_scalar_prefetch=0,
            grid=grid,
            in_specs=[
                pl.BlockSpec((tb, K), lambda i: (i, 0)),      # x: streamed per tile
                pl.BlockSpec((C_pad, K), lambda i: (0, 0)),   # weight: resident
                pl.BlockSpec((1, C_pad), lambda i: (0, 0)),   # bias: resident
            ],
            out_specs=pl.BlockSpec((tb, C_pad), lambda i: (i, 0)),
        ),
        compiler_params=pltpu.CompilerParams(
            dimension_semantics=("parallel",),
            vmem_limit_bytes=vmem_limit_bytes,
        ),
        cost_estimate=cost,
    )(x2d, weight_p, b2d)

    return out[:B, :C]


if __name__ == "__main__":
    key = jax.random.PRNGKey(0)
    kx, kw, kb = jax.random.split(key, 3)

    B = 8
    num_class = 16
    # x shaped so that flattening gives 2048 features (2 * 32 * 32 = 2048),
    # mirroring the torch x.view(B, -1) path into nn.Linear(2048, num_class).
    x = jax.random.normal(kx, (B, 2, 32, 32), dtype=jnp.float32)
    weight = jax.random.normal(kw, (num_class, 2048), dtype=jnp.float32) * 0.02
    bias = jax.random.normal(kb, (num_class,), dtype=jnp.float32) * 0.01

    out = classifier_forward(x, weight, bias)
    out = jax.block_until_ready(out)

    # Reference check in plain JAX (eval-mode dropout == identity).
    ref = jax.nn.sigmoid(x.reshape(B, -1) @ weight.T + bias)
    assert out.shape == (B, num_class)
    assert jnp.allclose(out, ref, atol=1e-5, rtol=1e-5)

    print("KERNEL_OK")
</pallas_src>

<mosaic_0001>
module attributes {stable_mosaic.version = 11 : i64} {
  func.func @classifier_kernel(%arg0: i32, %arg1: memref<8x2048xf32, #tpu.memory_space<vmem>>, %arg2: memref<128x2048xf32, #tpu.memory_space<vmem>>, %arg3: memref<1x128xf32, #tpu.memory_space<vmem>>, %arg4: memref<8x128xf32, #tpu.memory_space<vmem>>) attributes {dimension_semantics = [#tpu.dimension_semantics<parallel>], iteration_bounds = array<i64: 1>, scalar_prefetch = 0 : i64, scratch_operands = 0 : i64, tpu.core_type = #tpu.core_type<tc>, window_params = [{transform_indices = @transform_0, window_bounds = array<i64: 8, 2048>}, {pipeline_mode = #tpu.pipeline_mode<synchronous>, transform_indices = @transform_1, window_bounds = array<i64: 128, 2048>}, {pipeline_mode = #tpu.pipeline_mode<synchronous>, transform_indices = @transform_2, window_bounds = array<i64: 1, 128>}, {transform_indices = @transform_3, window_bounds = array<i64: 8, 128>}]} {
    %c0 = arith.constant 0 : index
    %c0_0 = arith.constant 0 : index
    %0 = vector.load %arg1[%c0, %c0_0] : memref<8x2048xf32, #tpu.memory_space<vmem>>, vector<8x2048xf32>
    %c0_1 = arith.constant 0 : index
    %c0_2 = arith.constant 0 : index
    %1 = vector.load %arg2[%c0_1, %c0_2] : memref<128x2048xf32, #tpu.memory_space<vmem>>, vector<128x2048xf32>
    %cst = arith.constant dense<0.000000e+00> : vector<8x128xf32>
    %2 = tpu.matmul %0, %1, %cst {dimension_numbers = #tpu.dot_dimension_numbers<[1], [1], [0], [0], [0, 0, 1, 0], [], []>} : vector<8x2048xf32>, vector<128x2048xf32>, vector<8x128xf32> -> vector<8x128xf32>
    %c0_3 = arith.constant 0 : index
    %c0_4 = arith.constant 0 : index
    %3 = vector.load %arg3[%c0_3, %c0_4] : memref<1x128xf32, #tpu.memory_space<vmem>>, vector<1x128xf32>
    %4 = vector.broadcast %3 : vector<1x128xf32> to vector<8x128xf32>
    %5 = arith.addf %2, %4 : vector<8x128xf32>
    %6 = arith.negf %5 : vector<8x128xf32>
    %7 = math.exp %6 : vector<8x128xf32>
    %cst_5 = arith.constant 1.000000e+00 : f32
    %8 = vector.broadcast %cst_5 : f32 to vector<8x128xf32>
    %9 = arith.addf %8, %7 : vector<8x128xf32>
    %10 = arith.divf %8, %9 : vector<8x128xf32>
    %c0_6 = arith.constant 0 : index
    %c0_7 = arith.constant 0 : index
    %11 = vector.load %arg4[%c0_6, %c0_7] : memref<8x128xf32, #tpu.memory_space<vmem>>, vector<8x128xf32>
    tpu.vector_store %arg4[%c0_6, %c0_7], %10 {strides = array<i32>} : memref<8x128xf32, #tpu.memory_space<vmem>>, vector<8x128xf32>,
    return
  }
  func.func @transform_0(%arg0: i32) -> (i32, i32) {
    %c0_i32 = arith.constant 0 : i32
    %c0_i32_0 = arith.constant 0 : i32
    return %arg0, %c0_i32 : i32, i32
  }
  func.func @transform_1(%arg0: i32) -> (i32, i32) {
    %c0_i32 = arith.constant 0 : i32
    %c0_i32_0 = arith.constant 0 : i32
    %c0_i32_1 = arith.constant 0 : i32
    return %c0_i32, %c0_i32_0 : i32, i32
  }
  func.func @transform_2(%arg0: i32) -> (i32, i32) {
    %c0_i32 = arith.constant 0 : i32
    %c0_i32_0 = arith.constant 0 : i32
    %c0_i32_1 = arith.constant 0 : i32
    return %c0_i32, %c0_i32_0 : i32, i32
  }
  func.func @transform_3(%arg0: i32) -> (i32, i32) {
    %c0_i32 = arith.constant 0 : i32
    %c0_i32_0 = arith.constant 0 : i32
    return %arg0, %c0_i32 : i32, i32
  }
}

</mosaic_0001>

<llo_original>
// kernel: tpu_custom_call.1
$region0: #{tpu_custom_call.1}
  #allocation0 [shape = 'u32[]', space=smem, size = 0x4, offset = 0x4, fixed_abs, tag = 'smem constant byte address 0x4 - core index']
  #allocation1 [shape = 'u32[144,128]{1,0:T(1,128)}', space=vmem, size = 0x12000, scoped, tag = 'internal scratch']
  %s0 = inlined_call_operand.hbm [shape: f32[8,2048], index: 0, kind: input, shape index: {}]
  %s1 = inlined_call_operand.hbm [shape: f32[128,2048], index: 1, kind: input, shape index: {}]
  %s2 = inlined_call_operand.vmem [shape: f32[1,128], index: 2, kind: input, shape index: {}]
  %s3 = inlined_call_operand.hbm [shape: f32[8,128], index: 3, kind: output, shape index: {}]
  %s4 = sld [smem:[#allocation0]]
  $region30: #{tpu_custom_call.1} parent=0
    _
  %s6 = ssub.s32 1, %s4
  %s7 = scalar_select 0, %s6, %s4
  $region1: #{tpu_custom_call.1} parent=0
    #allocation2 [shape = 'u8[65536]{0}', space=vmem, size = 0x10000, scoped, tag = 'input window, operand 0, single buffered']
    #allocation3 [shape = 's32[1]{0}', space=sflag, size = 0x4, scoped, tag = 'scoped memory for tpu_custom_call.1']
    #allocation4 [shape = 's32[1]{0}', space=sflag, size = 0x4, scoped, tag = 'scoped memory for tpu_custom_call.1']
    #allocation5 [shape = 'u8[1048576]{0}', space=vmem, size = 0x100000, scoped, tag = 'input window, operand 1, single buffered']
    #allocation6 [shape = 's32[1]{0}', space=sflag, size = 0x4, scoped, tag = 'scoped memory for tpu_custom_call.1']
    #allocation7 [shape = 'u8[4096]{0}', space=vmem, size = 0x1000, scoped, tag = 'output window, operand 0, single buffered']
    %8 = vsyncpa [#allocation3], 0
    %9 = vsyncpa [#allocation6], 0
    %10 = vsyncpa [#allocation4], 0
    // Predicated region
    $region2: #{tpu_custom_call.1} parent=1 // pred_check
      _
    $region3: #{tpu_custom_call.1} parent=1 // pred_check_branch
      %12 = sbr.rel (0) target = $region5
    $region4: #{tpu_custom_call.1} parent=1 // pred_region
      %s14 = ssub.s32 2048, 2048
      %15 = vsyncadd [#allocation3], %s14
      %s17 = sshll.u32 [#allocation2], 4
      %s18 = int_to_ptr.vmem [resolvable:$true] %s17
      %20 = dma.hbm_to_vmem [thread:$0]  %s0, 2048, %s18, [#allocation3]
    $region5: #{tpu_custom_call.1} parent=1 // pred_fallthru
      _
    // Predicated region
    $region6: #{tpu_custom_call.1} parent=1 // pred_check
      _
    $region7: #{tpu_custom_call.1} parent=1 // pred_check_branch
      %22 = sbr.rel (0) target = $region9
    $region8: #{tpu_custom_call.1} parent=1 // pred_region
      %s24 = ssub.s32 32768, 32768
      %25 = vsyncadd [#allocation6], %s24
      %s26 = sshll.u32 [#allocation5], 4
      %s27 = int_to_ptr.vmem [resolvable:$true] %s26
      %32 = dma.hbm_to_vmem [thread:$0]  %s1, 32768, %s27, [#allocation6], 2048, 2048, 128
    $region9: #{tpu_custom_call.1} parent=1 // pred_fallthru
      _
    // Predicated region
    $region10: #{tpu_custom_call.1} parent=1 // pred_check
      _
    $region11: #{tpu_custom_call.1} parent=1 // pred_check_branch
      %34 = sbr.rel (0) target = $region13
    $region12: #{tpu_custom_call.1} parent=1 // pred_region
      _
    $region13: #{tpu_custom_call.1} parent=1 // pred_fallthru
      _
    // Predicated region
    $region14: #{tpu_custom_call.1} parent=1 // pred_check
      _
    $region15: #{tpu_custom_call.1} parent=1 // pred_check_branch
      %36 = sbr.rel (0) target = $region17
    $region16: #{tpu_custom_call.1} parent=1 // pred_region
      %37 = dma.done [#allocation3], 2048
    $region17: #{tpu_custom_call.1} parent=1 // pred_fallthru
      _
    // Predicated region
    $region18: #{tpu_custom_call.1} parent=1 // pred_check
      _
    $region19: #{tpu_custom_call.1} parent=1 // pred_check_branch
      %39 = sbr.rel (0) target = $region21
    $region20: #{tpu_custom_call.1} parent=1 // pred_region
      %40 = dma.done [#allocation6], 32768
    $region21: #{tpu_custom_call.1} parent=1 // pred_fallthru
      _
    %v41 = vld [vmem:[#allocation2] sm:$0xff]
    %v42 = vld [vmem:[#allocation2 + $0x8] sm:$0xff]
    %v43 = vld [vmem:[#allocation2 + $0x10] sm:$0xff]
    %v44 = vld [vmem:[#allocation2 + $0x18] sm:$0xff]
    %v45 = vld [vmem:[#allocation2 + $0x20] sm:$0xff]
    %v46 = vld [vmem:[#allocation2 + $0x28] sm:$0xff]
    %v47 = vld [vmem:[#allocation2 + $0x30] sm:$0xff]
    %v48 = vld [vmem:[#allocation2 + $0x38] sm:$0xff]
    %v49 = vld [vmem:[#allocation2 + $0x40] sm:$0xff]
    %v50 = vld [vmem:[#allocation2 + $0x48] sm:$0xff]
    %v51 = vld [vmem:[#allocation2 + $0x50] sm:$0xff]
    %v52 = vld [vmem:[#allocation2 + $0x58] sm:$0xff]
    %v53 = vld [vmem:[#allocation2 + $0x60] sm:$0xff]
    %v54 = vld [vmem:[#allocation2 + $0x68] sm:$0xff]
    %v55 = vld [vmem:[#allocation2 + $0x70] sm:$0xff]
    %v56 = vld [vmem:[#allocation2 + $0x78] sm:$0xff]
    %v57 = vld [vmem:[#allocation5] sm:$0xff]
    %v58 = vld [vmem:[#allocation5 + $0x8] sm:$0xff]
    %v59 = vld [vmem:[#allocation5 + $0x10] sm:$0xff]
    %v60 = vld [vmem:[#allocation5 + $0x18] sm:$0xff]
    %v61 = vld [vmem:[#allocation5 + $0x20] sm:$0xff]
    %v62 = vld [vmem:[#allocation5 + $0x28] sm:$0xff]
    %v63 = vld [vmem:[#allocation5 + $0x30] sm:$0xff]
    %v64 = vld [vmem:[#allocation5 + $0x38] sm:$0xff]
    %v65 = vld [vmem:[#allocation5 + $0x40] sm:$0xff]
    %v66 = vld [vmem:[#allocation5 + $0x48] sm:$0xff]
    %v67 = vld [vmem:[#allocation5 + $0x50] sm:$0xff]
    %v68 = vld [vmem:[#allocation5 + $0x58] sm:$0xff]
    %v69 = vld [vmem:[#allocation5 + $0x60] sm:$0xff]
    %v70 = vld [vmem:[#allocation5 + $0x68] sm:$0xff]
    %v71 = vld [vmem:[#allocation5 + $0x70] sm:$0xff]
    %v72 = vld [vmem:[#allocation5 + $0x78] sm:$0xff]
    %v73 = vld [vmem:[#allocation5 + $0x80] sm:$0xff]
    %v74 = vld [vmem:[#allocation5 + $0x88] sm:$0xff]
    %v75 = vld [vmem:[#allocation5 + $0x90] sm:$0xff]
    %v76 = vld [vmem:[#allocation5 + $0x98] sm:$0xff]
    %v77 = vld [vmem:[#allocation5 + $0xa0] sm:$0xff]
    %v78 = vld [vmem:[#allocation5 + $0xa8] sm:$0xff]
    %v79 = vld [vmem:[#allocation5 + $0xb0] sm:$0xff]
    %v80 = vld [vmem:[#allocation5 + $0xb8] sm:$0xff]
    %v81 = vld [vmem:[#allocation5 + $0xc0] sm:$0xff]
    %v82 = vld [vmem:[#allocation5 + $0xc8] sm:$0xff]
    %v83 = vld [vmem:[#allocation5 + $0xd0] sm:$0xff]
    %v84 = vld [vmem:[#allocation5 + $0xd8] sm:$0xff]
    %v85 = vld [vmem:[#allocation5 + $0xe0] sm:$0xff]
    %v86 = vld [vmem:[#allocation5 + $0xe8] sm:$0xff]
    %v87 = vld [vmem:[#allocation5 + $0xf0] sm:$0xff]
    %v88 = vld [vmem:[#allocation5 + $0xf8] sm:$0xff]
    %v89 = vld [vmem:[#allocation5 + $0x100] sm:$0xff]
    %v90 = vld [vmem:[#allocation5 + $0x108] sm:$0xff]
    %v91 = vld [vmem:[#allocation5 + $0x110] sm:$0xff]
    %v92 = vld [vmem:[#allocation5 + $0x118] sm:$0xff]
    %v93 = vld [vmem:[#allocation5 + $0x120] sm:$0xff]
    %v94 = vld [vmem:[#allocation5 + $0x128] sm:$0xff]
    %v95 = vld [vmem:[#allocation5 + $0x130] sm:$0xff]
    %v96 = vld [vmem:[#allocation5 + $0x138] sm:$0xff]
    %v97 = vld [vmem:[#allocation5 + $0x140] sm:$0xff]
    %v98 = vld [vmem:[#allocation5 + $0x148] sm:$0xff]
    %v99 = vld [vmem:[#allocation5 + $0x150] sm:$0xff]
    %v100 = vld [vmem:[#allocation5 + $0x158] sm:$0xff]
    %v101 = vld [vmem:[#allocation5 + $0x160] sm:$0xff]
    %v102 = vld [vmem:[#allocation5 + $0x168] sm:$0xff]
    %v103 = vld [vmem:[#allocation5 + $0x170] sm:$0xff]
    %v104 = vld [vmem:[#allocation5 + $0x178] sm:$0xff]
    %v105 = vld [vmem:[#allocation5 + $0x180] sm:$0xff]
    %v106 = vld [vmem:[#allocation5 + $0x188] sm:$0xff]
    %v107 = vld [vmem:[#allocation5 + $0x190] sm:$0xff]
    %v108 = vld [vmem:[#allocation5 + $0x198] sm:$0xff]
    %v109 = vld [vmem:[#allocation5 + $0x1a0] sm:$0xff]
    %v110 = vld [vmem:[#allocation5 + $0x1a8] sm:$0xff]
    %v111 = vld [vmem:[#allocation5 + $0x1b0] sm:$0xff]
    %v112 = vld [vmem:[#allocation5 + $0x1b8] sm:$0xff]
    %v113 = vld [vmem:[#allocation5 + $0x1c0] sm:$0xff]
    %v114 = vld [vmem:[#allocation5 + $0x1c8] sm:$0xff]
    %v115 = vld [vmem:[#allocation5 + $0x1d0] sm:$0xff]
    %v116 = vld [vmem:[#allocation5 + $0x1d8] sm:$0xff]
    %v117 = vld [vmem:[#allocation5 + $0x1e0] sm:$0xff]
    %v118 = vld [vmem:[#allocation5 + $0x1e8] sm:$0xff]
    %v119 = vld [vmem:[#allocation5 + $0x1f0] sm:$0xff]
    %v120 = vld [vmem:[#allocation5 + $0x1f8] sm:$0xff]
    %v121 = vld [vmem:[#allocation5 + $0x200] sm:$0xff]
    %v122 = vld [vmem:[#allocation5 + $0x208] sm:$0xff]
    %v123 = vld [vmem:[#allocation5 + $0x210] sm:$0xff]
    %v124 = vld [vmem:[#allocation5 + $0x218] sm:$0xff]
    %v125 = vld [vmem:[#allocation5 + $0x220] sm:$0xff]
    %v126 = vld [vmem:[#allocation5 + $0x228] sm:$0xff]
    %v127 = vld [vmem:[#allocation5 + $0x230] sm:$0xff]
    %v128 = vld [vmem:[#allocation5 + $0x238] sm:$0xff]
    %v129 = vld [vmem:[#allocation5 + $0x240] sm:$0xff]
    %v130 = vld [vmem:[#allocation5 + $0x248] sm:$0xff]
    %v131 = vld [vmem:[#allocation5 + $0x250] sm:$0xff]
    %v132 = vld [vmem:[#allocation5 + $0x258] sm:$0xff]
    %v133 = vld [vmem:[#allocation5 + $0x260] sm:$0xff]
    %v134 = vld [vmem:[#allocation5 + $0x268] sm:$0xff]
    %v135 = vld [vmem:[#allocation5 + $0x270] sm:$0xff]
    %v136 = vld [vmem:[#allocation5 + $0x278] sm:$0xff]
    %v137 = vld [vmem:[#allocation5 + $0x280] sm:$0xff]
    %v138 = vld [vmem:[#allocation5 + $0x288] sm:$0xff]
    %v139 = vld [vmem:[#allocation5 + $0x290] sm:$0xff]
    %v140 = vld [vmem:[#allocation5 + $0x298] sm:$0xff]
    %v141 = vld [vmem:[#allocation5 + $0x2a0] sm:$0xff]
    %v142 = vld [vmem:[#allocation5 + $0x2a8] sm:$0xff]
    %v143 = vld [vmem:[#allocation5 + $0x2b0] sm:$0xff]
    %v144 = vld [vmem:[#allocation5 + $0x2b8] sm:$0xff]
    %v145 = vld [vmem:[#allocation5 + $0x2c0] sm:$0xff]
    %v146 = vld [vmem:[#allocation5 + $0x2c8] sm:$0xff]
    %v147 = vld [vmem:[#allocation5 + $0x2d0] sm:$0xff]
    %v148 = vld [vmem:[#allocation5 + $0x2d8] sm:$0xff]
    %v149 = vld [vmem:[#allocation5 + $0x2e0] sm:$0xff]
    %v150 = vld [vmem:[#allocation5 + $0x2e8] sm:$0xff]
    %v151 = vld [vmem:[#allocation5 + $0x2f0] sm:$0xff]
    %v152 = vld [vmem:[#allocation5 + $0x2f8] sm:$0xff]
    %v153 = vld [vmem:[#allocation5 + $0x300] sm:$0xff]
    %v154 = vld [vmem:[#allocation5 + $0x308] sm:$0xff]
    %v155 = vld [vmem:[#allocation5 + $0x310] sm:$0xff]
    %v156 = vld [vmem:[#allocation5 + $0x318] sm:$0xff]
    %v157 = vld [vmem:[#allocation5 + $0x320] sm:$0xff]
    %v158 = vld [vmem:[#allocation5 + $0x328] sm:$0xff]
    %v159 = vld [vmem:[#allocation5 + $0x330] sm:$0xff]
    %v160 = vld [vmem:[#allocation5 + $0x338] sm:$0xff]
    %v161 = vld [vmem:[#allocation5 + $0x340] sm:$0xff]
    %v162 = vld [vmem:[#allocation5 + $0x348] sm:$0xff]
    %v163 = vld [vmem:[#allocation5 + $0x350] sm:$0xff]
    %v164 = vld [vmem:[#allocation5 + $0x358] sm:$0xff]
    %v165 = vld [vmem:[#allocation5 + $0x360] sm:$0xff]
    %v166 = vld [vmem:[#allocation5 + $0x368] sm:$0xff]
    %v167 = vld [vmem:[#allocation5 + $0x370] sm:$0xff]
    %v168 = vld [vmem:[#allocation5 + $0x378] sm:$0xff]
    %v169 = vld [vmem:[#allocation5 + $0x380] sm:$0xff]
    %v170 = vld [vmem:[#allocation5 + $0x388] sm:$0xff]
    %v171 = vld [vmem:[#allocation5 + $0x390] sm:$0xff]
    %v172 = vld [vmem:[#allocation5 + $0x398] sm:$0xff]
    %v173 = vld [vmem:[#allocation5 + $0x3a0] sm:$0xff]
    %v174 = vld [vmem:[#allocation5 + $0x3a8] sm:$0xff]
    %v175 = vld [vmem:[#allocation5 + $0x3b0] sm:$0xff]
    %v176 = vld [vmem:[#allocation5 + $0x3b8] sm:$0xff]
    %v177 = vld [vmem:[#allocation5 + $0x3c0] sm:$0xff]
    %v178 = vld [vmem:[#allocation5 + $0x3c8] sm:$0xff]
    %v179 = vld [vmem:[#allocation5 + $0x3d0] sm:$0xff]
    %v180 = vld [vmem:[#allocation5 + $0x3d8] sm:$0xff]
    %v181 = vld [vmem:[#allocation5 + $0x3e0] sm:$0xff]
    %v182 = vld [vmem:[#allocation5 + $0x3e8] sm:$0xff]
    %v183 = vld [vmem:[#allocation5 + $0x3f0] sm:$0xff]
    %v184 = vld [vmem:[#allocation5 + $0x3f8] sm:$0xff]
    %v185 = vld [vmem:[#allocation5 + $0x400] sm:$0xff]
    %v186 = vld [vmem:[#allocation5 + $0x408] sm:$0xff]
    %v187 = vld [vmem:[#allocation5 + $0x410] sm:$0xff]
    %v188 = vld [vmem:[#allocation5 + $0x418] sm:$0xff]
    %v189 = vld [vmem:[#allocation5 + $0x420] sm:$0xff]
    %v190 = vld [vmem:[#allocation5 + $0x428] sm:$0xff]
    %v191 = vld [vmem:[#allocation5 + $0x430] sm:$0xff]
    %v192 = vld [vmem:[#allocation5 + $0x438] sm:$0xff]
    %v193 = vld [vmem:[#allocation5 + $0x440] sm:$0xff]
    %v194 = vld [vmem:[#allocation5 + $0x448] sm:$0xff]
    %v195 = vld [vmem:[#allocation5 + $0x450] sm:$0xff]
    %v196 = vld [vmem:[#allocation5 + $0x458] sm:$0xff]
    %v197 = vld [vmem:[#allocation5 + $0x460] sm:$0xff]
    %v198 = vld [vmem:[#allocation5 + $0x468] sm:$0xff]
    %v199 = vld [vmem:[#allocation5 + $0x470] sm:$0xff]
    %v200 = vld [vmem:[#allocation5 + $0x478] sm:$0xff]
    %v201 = vld [vmem:[#allocation5 + $0x480] sm:$0xff]
    %v202 = vld [vmem:[#allocation5 + $0x488] sm:$0xff]
    %v203 = vld [vmem:[#allocation5 + $0x490] sm:$0xff]
    %v204 = vld [vmem:[#allocation5 + $0x498] sm:$0xff]
    %v205 = vld [vmem:[#allocation5 + $0x4a0] sm:$0xff]
    %v206 = vld [vmem:[#allocation5 + $0x4a8] sm:$0xff]
    %v207 = vld [vmem:[#allocation5 + $0x4b0] sm:$0xff]
    %v208 = vld [vmem:[#allocation5 + $0x4b8] sm:$0xff]
    %v209 = vld [vmem:[#allocation5 + $0x4c0] sm:$0xff]
    %v210 = vld [vmem:[#allocation5 + $0x4c8] sm:$0xff]
    %v211 = vld [vmem:[#allocation5 + $0x4d0] sm:$0xff]
    %v212 = vld [vmem:[#allocation5 + $0x4d8] sm:$0xff]
    %v213 = vld [vmem:[#allocation5 + $0x4e0] sm:$0xff]
    %v214 = vld [vmem:[#allocation5 + $0x4e8] sm:$0xff]
    %v215 = vld [vmem:[#allocation5 + $0x4f0] sm:$0xff]
    %v216 = vld [vmem:[#allocation5 + $0x4f8] sm:$0xff]
    %v217 = vld [vmem:[#allocation5 + $0x500] sm:$0xff]
    %v218 = vld [vmem:[#allocation5 + $0x508] sm:$0xff]
    %v219 = vld [vmem:[#allocation5 + $0x510] sm:$0xff]
    %v220 = vld [vmem:[#allocation5 + $0x518] sm:$0xff]
    %v221 = vld [vmem:[#allocation5 + $0x520] sm:$0xff]
    %v222 = vld [vmem:[#allocation5 + $0x528] sm:$0xff]
    %v223 = vld [vmem:[#allocation5 + $0x530] sm:$0xff]
    %v224 = vld [vmem:[#allocation5 + $0x538] sm:$0xff]
    %v225 = vld [vmem:[#allocation5 + $0x540] sm:$0xff]
    %v226 = vld [vmem:[#allocation5 + $0x548] sm:$0xff]
    %v227 = vld [vmem:[#allocation5 + $0x550] sm:$0xff]
    %v228 = vld [vmem:[#allocation5 + $0x558] sm:$0xff]
    %v229 = vld [vmem:[#allocation5 + $0x560] sm:$0xff]
    %v230 = vld [vmem:[#allocation5 + $0x568] sm:$0xff]
    %v231 = vld [vmem:[#allocation5 + $0x570] sm:$0xff]
    %v232 = vld [vmem:[#allocation5 + $0x578] sm:$0xff]
    %v233 = vld [vmem:[#allocation5 + $0x580] sm:$0xff]
    %v234 = vld [vmem:[#allocation5 + $0x588] sm:$0xff]
    %v235 = vld [vmem:[#allocation5 + $0x590] sm:$0xff]
    %v236 = vld [vmem:[#allocation5 + $0x598] sm:$0xff]
    %v237 = vld [vmem:[#allocation5 + $0x5a0] sm:$0xff]
    %v238 = vld [vmem:[#allocation5 + $0x5a8] sm:$0xff]
    %v239 = vld [vmem:[#allocation5 + $0x5b0] sm:$0xff]
    %v240 = vld [vmem:[#allocation5 + $0x5b8] sm:$0xff]
    %v241 = vld [vmem:[#allocation5 + $0x5c0] sm:$0xff]
    %v242 = vld [vmem:[#allocation5 + $0x5c8] sm:$0xff]
    %v243 = vld [vmem:[#allocation5 + $0x5d0] sm:$0xff]
    %v244 = vld [vmem:[#allocation5 + $0x5d8] sm:$0xff]
    %v245 = vld [vmem:[#allocation5 + $0x5e0] sm:$0xff]
    %v246 = vld [vmem:[#allocation5 + $0x5e8] sm:$0xff]
    %v247 = vld [vmem:[#allocation5 + $0x5f0] sm:$0xff]
    %v248 = vld [vmem:[#allocation5 + $0x5f8] sm:$0xff]
    %v249 = vld [vmem:[#allocation5 + $0x600] sm:$0xff]
    %v250 = vld [vmem:[#allocation5 + $0x608] sm:$0xff]
    %v251 = vld [vmem:[#allocation5 + $0x610] sm:$0xff]
    %v252 = vld [vmem:[#allocation5 + $0x618] sm:$0xff]
    %v253 = vld [vmem:[#allocation5 + $0x620] sm:$0xff]
    %v254 = vld [vmem:[#allocation5 + $0x628] sm:$0xff]
    %v255 = vld [vmem:[#allocation5 + $0x630] sm:$0xff]
    %v256 = vld [vmem:[#allocation5 + $0x638] sm:$0xff]
    %v257 = vld [vmem:[#allocation5 + $0x640] sm:$0xff]
    %v258 = vld [vmem:[#allocation5 + $0x648] sm:$0xff]
    %v259 = vld [vmem:[#allocation5 + $0x650] sm:$0xff]
    %v260 = vld [vmem:[#allocation5 + $0x658] sm:$0xff]
    %v261 = vld [vmem:[#allocation5 + $0x660] sm:$0xff]
    %v262 = vld [vmem:[#allocation5 + $0x668] sm:$0xff]
    %v263 = vld [vmem:[#allocation5 + $0x670] sm:$0xff]
    %v264 = vld [vmem:[#allocation5 + $0x678] sm:$0xff]
    %v265 = vld [vmem:[#allocation5 + $0x680] sm:$0xff]
    %v266 = vld [vmem:[#allocation5 + $0x688] sm:$0xff]
    %v267 = vld [vmem:[#allocation5 + $0x690] sm:$0xff]
    %v268 = vld [vmem:[#allocation5 + $0x698] sm:$0xff]
    %v269 = vld [vmem:[#allocation5 + $0x6a0] sm:$0xff]
    %v270 = vld [vmem:[#allocation5 + $0x6a8] sm:$0xff]
    %v271 = vld [vmem:[#allocation5 + $0x6b0] sm:$0xff]
    %v272 = vld [vmem:[#allocation5 + $0x6b8] sm:$0xff]
    %v273 = vld [vmem:[#allocation5 + $0x6c0] sm:$0xff]
    %v274 = vld [vmem:[#allocation5 + $0x6c8] sm:$0xff]
    %v275 = vld [vmem:[#allocation5 + $0x6d0] sm:$0xff]
    %v276 = vld [vmem:[#allocation5 + $0x6d8] sm:$0xff]
    %v277 = vld [vmem:[#allocation5 + $0x6e0] sm:$0xff]
    %v278 = vld [vmem:[#allocation5 + $0x6e8] sm:$0xff]
    %v279 = vld [vmem:[#allocation5 + $0x6f0] sm:$0xff]
    %v280 = vld [vmem:[#allocation5 + $0x6f8] sm:$0xff]
    %v281 = vld [vmem:[#allocation5 + $0x700] sm:$0xff]
    %v282 = vld [vmem:[#allocation5 + $0x708] sm:$0xff]
    %v283 = vld [vmem:[#allocation5 + $0x710] sm:$0xff]
    %v284 = vld [vmem:[#allocation5 + $0x718] sm:$0xff]
    %v285 = vld [vmem:[#allocation5 + $0x720] sm:$0xff]
    %v286 = vld [vmem:[#allocation5 + $0x728] sm:$0xff]
    %v287 = vld [vmem:[#allocation5 + $0x730] sm:$0xff]
    %v288 = vld [vmem:[#allocation5 + $0x738] sm:$0xff]
    %v289 = vld [vmem:[#allocation5 + $0x740] sm:$0xff]
    %v290 = vld [vmem:[#allocation5 + $0x748] sm:$0xff]
    %v291 = vld [vmem:[#allocation5 + $0x750] sm:$0xff]
    %v292 = vld [vmem:[#allocation5 + $0x758] sm:$0xff]
    %v293 = vld [vmem:[#allocation5 + $0x760] sm:$0xff]
    %v294 = vld [vmem:[#allocation5 + $0x768] sm:$0xff]
    %v295 = vld [vmem:[#allocation5 + $0x770] sm:$0xff]
    %v296 = vld [vmem:[#allocation5 + $0x778] sm:$0xff]
    %v297 = vld [vmem:[#allocation5 + $0x780] sm:$0xff]
    %v298 = vld [vmem:[#allocation5 + $0x788] sm:$0xff]
    %v299 = vld [vmem:[#allocation5 + $0x790] sm:$0xff]
    %v300 = vld [vmem:[#allocation5 + $0x798] sm:$0xff]
    %v301 = vld [vmem:[#allocation5 + $0x7a0] sm:$0xff]
    %v302 = vld [vmem:[#allocation5 + $0x7a8] sm:$0xff]
    %v303 = vld [vmem:[#allocation5 + $0x7b0] sm:$0xff]
    %v304 = vld [vmem:[#allocation5 + $0x7b8] sm:$0xff]
    %v305 = vld [vmem:[#allocation5 + $0x7c0] sm:$0xff]
    %v306 = vld [vmem:[#allocation5 + $0x7c8] sm:$0xff]
    %v307 = vld [vmem:[#allocation5 + $0x7d0] sm:$0xff]
    %v308 = vld [vmem:[#allocation5 + $0x7d8] sm:$0xff]
    %v309 = vld [vmem:[#allocation5 + $0x7e0] sm:$0xff]
    %v310 = vld [vmem:[#allocation5 + $0x7e8] sm:$0xff]
    %v311 = vld [vmem:[#allocation5 + $0x7f0] sm:$0xff]
    %v312 = vld [vmem:[#allocation5 + $0x7f8] sm:$0xff]
    %v313 = vld [vmem:[%s2] sm:$0x1]
    %v315 = vlaneseq
    %v316 = vshrl.u32 %v315, 7
    %v317 = vsub.s32 0, %v316
    %v318 = vrot.slane %v313, %v317
    %320 = vmatprep.subr.mxu0 %v298
    %321 = vmatpush1.xpose.msra.mxu0 %v297
    %322 = vmatprep.subr.mxu0 %v282
    %323 = vmatpush1.xpose.msra.mxu0 %v281
    %324 = vmatprep.subr.mxu0 %v266
    %325 = vmatpush1.xpose.msra.mxu0 %v265
    %326 = vmatprep.subr.mxu0 %v250
    %327 = vmatpush1.xpose.msra.mxu0 %v249
    %328 = vmatprep.subr.mxu0 %v234
    %329 = vmatpush1.xpose.msra.mxu0 %v233
    %330 = vmatprep.subr.mxu0 %v218
    %331 = vmatpush1.xpose.msra.mxu0 %v217
    %332 = vmatprep.subr.mxu0 %v202
    %333 = vmatpush1.xpose.msra.mxu0 %v201
    %334 = vmatprep.subr.mxu0 %v186
    %335 = vmatpush1.xpose.msra.mxu0 %v185
    %336 = vmatprep.subr.mxu0 %v170
    %337 = vmatpush1.xpose.msra.mxu0 %v169
    %338 = vmatprep.subr.mxu0 %v154
    %339 = vmatpush1.xpose.msra.mxu0 %v153
    %340 = vmatprep.subr.mxu0 %v138
    %341 = vmatpush1.xpose.msra.mxu0 %v137
    %342 = vmatprep.subr.mxu0 %v122
    %343 = vmatpush1.xpose.msra.mxu0 %v121
    %344 = vmatprep.subr.mxu0 %v106
    %345 = vmatpush1.xpose.msra.mxu0 %v105
    %346 = vmatprep.subr.mxu0 %v90
    %347 = vmatpush1.xpose.msra.mxu0 %v89
    %348 = vmatprep.subr.mxu0 %v74
    %349 = vmatpush1.xpose.msra.mxu0 %v73
    %350 = vmatprep.subr.mxu0 %v58
    %351 = vmatpush1.xpose.msra.mxu0 %v57
    %352 = vmatprep.subr.mxu0 0.0
    %353 = vmatpush2.xpose.msra.mxu0 0.0
    %354 = vmatprep.subr.mxu0 0.0
    %355 = vmatpush2.xpose.msra.mxu0 0.0
    %356 = vmatprep.subr.mxu0 0.0
    %357 = vmatpush2.xpose.msra.mxu0 0.0
    %358 = vmatprep.subr.mxu0 0.0
    %359 = vmatpush2.xpose.msra.mxu0 0.0
    %360 = vmatprep.subr.mxu0 0.0
    %361 = vmatpush2.xpose.msra.mxu0 0.0
    %362 = vmatprep.subr.mxu0 0.0
    %363 = vmatpush2.xpose.msra.mxu0 0.0
    %364 = vmatprep.subr.mxu0 0.0
    %365 = vmatpush2.xpose.msra.mxu0 0.0
    %366 = vmatprep.subr.mxu0 0.0
    %367 = vmatpush2.xpose.msra.mxu0 0.0
    %368 = vmatprep.subr.mxu0 0.0
    %369 = vmatpush2.xpose.msra.mxu0 0.0
    %370 = vmatprep.subr.mxu0 0.0
    %371 = vmatpush2.xpose.msra.mxu0 0.0
    %372 = vmatprep.subr.mxu0 0.0
    %373 = vmatpush2.xpose.msra.mxu0 0.0
    %374 = vmatprep.subr.mxu0 0.0
    %375 = vmatpush2.xpose.msra.mxu0 0.0
    %376 = vmatprep.subr.mxu0 0.0
    %377 = vmatpush2.xpose.msra.mxu0 0.0
    %378 = vmatprep.subr.mxu0 0.0
    %379 = vmatpush2.xpose.msra.mxu0 0.0
    %380 = vmatprep.subr.mxu0 0.0
    %381 = vmatpush2.xpose.msra.mxu0 0.0
    %382 = vmatprep.subr.mxu0 0.0
    %383 = vmatpush2.xpose.msra.mxu0 0.0
    %384 = vmatprep.mubr.f32.mxu0 %v42
    %385 = vmatmul.mubr.f32.gmra.mxu0 %v41
    %v386 = vpop.f32.mrf.mxu0
    %v387 = vadd.f32 %v318, %v386
    %v388 = vpop.f32.mrf.mxu0
    %389 = vdwg.mxu0
    %390 = vmatprep.subr.mxu0 %v300
    %391 = vmatpush1.xpose.msra.mxu0 %v299
    %392 = vmatprep.subr.mxu0 %v284
    %393 = vmatpush1.xpose.msra.mxu0 %v283
    %394 = vmatprep.subr.mxu0 %v268
    %395 = vmatpush1.xpose.msra.mxu0 %v267
    %396 = vmatprep.subr.mxu0 %v252
    %397 = vmatpush1.xpose.msra.mxu0 %v251
    %398 = vmatprep.subr.mxu0 %v236
    %399 = vmatpush1.xpose.msra.mxu0 %v235
    %400 = vmatprep.subr.mxu0 %v220
    %401 = vmatpush1.xpose.msra.mxu0 %v219
    %402 = vmatprep.subr.mxu0 %v204
    %403 = vmatpush1.xpose.msra.mxu0 %v203
    %404 = vmatprep.subr.mxu0 %v188
    %405 = vmatpush1.xpose.msra.mxu0 %v187
    %406 = vmatprep.subr.mxu0 %v172
    %407 = vmatpush1.xpose.msra.mxu0 %v171
    %408 = vmatprep.subr.mxu0 %v156
    %409 = vmatpush1.xpose.msra.mxu0 %v155
    %410 = vmatprep.subr.mxu0 %v140
    %411 = vmatpush1.xpose.msra.mxu0 %v139
    %412 = vmatprep.subr.mxu0 %v124
    %413 = vmatpush1.xpose.msra.mxu0 %v123
    %414 = vmatprep.subr.mxu0 %v108
    %415 = vmatpush1.xpose.msra.mxu0 %v107
    %416 = vmatprep.subr.mxu0 %v92
    %417 = vmatpush1.xpose.msra.mxu0 %v91
    %418 = vmatprep.subr.mxu0 %v76
    %419 = vmatpush1.xpose.msra.mxu0 %v75
    %420 = vmatprep.subr.mxu0 %v60
    %421 = vmatpush1.xpose.msra.mxu0 %v59
    %422 = vmatprep.subr.mxu0 0.0
    %423 = vmatpush2.xpose.msra.mxu0 0.0
    %424 = vmatprep.subr.mxu0 0.0
    %425 = vmatpush2.xpose.msra.mxu0 0.0
    %426 = vmatprep.subr.mxu0 0.0
    %427 = vmatpush2.xpose.msra.mxu0 0.0
    %428 = vmatprep.subr.mxu0 0.0
    %429 = vmatpush2.xpose.msra.mxu0 0.0
    %430 = vmatprep.subr.mxu0 0.0
    %431 = vmatpush2.xpose.msra.mxu0 0.0
    %432 = vmatprep.subr.mxu0 0.0
    %433 = vmatpush2.xpose.msra.mxu0 0.0
    %434 = vmatprep.subr.mxu0 0.0
    %435 = vmatpush2.xpose.msra.mxu0 0.0
    %436 = vmatprep.subr.mxu0 0.0
    %437 = vmatpush2.xpose.msra.mxu0 0.0
    %438 = vmatprep.subr.mxu0 0.0
    %439 = vmatpush2.xpose.msra.mxu0 0.0
    %440 = vmatprep.subr.mxu0 0.0
    %441 = vmatpush2.xpose.msra.mxu0 0.0
    %442 = vmatprep.subr.mxu0 0.0
    %443 = vmatpush2.xpose.msra.mxu0 0.0
    %444 = vmatprep.subr.mxu0 0.0
    %445 = vmatpush2.xpose.msra.mxu0 0.0
    %446 = vmatprep.subr.mxu0 0.0
    %447 = vmatpush2.xpose.msra.mxu0 0.0
    %448 = vmatprep.subr.mxu0 0.0
    %449 = vmatpush2.xpose.msra.mxu0 0.0
    %450 = vmatprep.subr.mxu0 0.0
    %451 = vmatpush2.xpose.msra.mxu0 0.0
    %452 = vmatprep.subr.mxu0 0.0
    %453 = vmatpush2.xpose.msra.mxu0 0.0
    %454 = vmatprep.mubr.f32.mxu0 %v44
    %455 = vmatmul.mubr.f32.gmra.mxu0 %v43
    %v456 = vpop.f32.mrf.mxu0
    %v457 = vadd.f32 %v387, %v456
    %v458 = vpop.f32.mrf.mxu0
    %459 = vdwg.mxu0
    %460 = vmatprep.subr.mxu0 %v302
    %461 = vmatpush1.xpose.msra.mxu0 %v301
    %462 = vmatprep.subr.mxu0 %v286
    %463 = vmatpush1.xpose.msra.mxu0 %v285
    %464 = vmatprep.subr.mxu0 %v270
    %465 = vmatpush1.xpose.msra.mxu0 %v269
    %466 = vmatprep.subr.mxu0 %v254
    %467 = vmatpush1.xpose.msra.mxu0 %v253
    %468 = vmatprep.subr.mxu0 %v238
    %469 = vmatpush1.xpose.msra.mxu0 %v237
    %470 = vmatprep.subr.mxu0 %v222
    %471 = vmatpush1.xpose.msra.mxu0 %v221
    %472 = vmatprep.subr.mxu0 %v206
    %473 = vmatpush1.xpose.msra.mxu0 %v205
    %474 = vmatprep.subr.mxu0 %v190
    %475 = vmatpush1.xpose.msra.mxu0 %v189
    %476 = vmatprep.subr.mxu0 %v174
    %477 = vmatpush1.xpose.msra.mxu0 %v173
    %478 = vmatprep.subr.mxu0 %v158
    %479 = vmatpush1.xpose.msra.mxu0 %v157
    %480 = vmatprep.subr.mxu0 %v142
    %481 = vmatpush1.xpose.msra.mxu0 %v141
    %482 = vmatprep.subr.mxu0 %v126
    %483 = vmatpush1.xpose.msra.mxu0 %v125
    %484 = vmatprep.subr.mxu0 %v110
    %485 = vmatpush1.xpose.msra.mxu0 %v109
    %486 = vmatprep.subr.mxu0 %v94
    %487 = vmatpush1.xpose.msra.mxu0 %v93
    %488 = vmatprep.subr.mxu0 %v78
    %489 = vmatpush1.xpose.msra.mxu0 %v77
    %490 = vmatprep.subr.mxu0 %v62
    %491 = vmatpush1.xpose.msra.mxu0 %v61
    %492 = vmatprep.subr.mxu0 0.0
    %493 = vmatpush2.xpose.msra.mxu0 0.0
    %494 = vmatprep.subr.mxu0 0.0
    %495 = vmatpush2.xpose.msra.mxu0 0.0
    %496 = vmatprep.subr.mxu0 0.0
    %497 = vmatpush2.xpose.msra.mxu0 0.0
    %498 = vmatprep.subr.mxu0 0.0
    %499 = vmatpush2.xpose.msra.mxu0 0.0
    %500 = vmatprep.subr.mxu0 0.0
    %501 = vmatpush2.xpose.msra.mxu0 0.0
    %502 = vmatprep.subr.mxu0 0.0
    %503 = vmatpush2.xpose.msra.mxu0 0.0
    %504 = vmatprep.subr.mxu0 0.0
    %505 = vmatpush2.xpose.msra.mxu0 0.0
    %506 = vmatprep.subr.mxu0 0.0
    %507 = vmatpush2.xpose.msra.mxu0 0.0
    %508 = vmatprep.subr.mxu0 0.0
    %509 = vmatpush2.xpose.msra.mxu0 0.0
    %510 = vmatprep.subr.mxu0 0.0
    %511 = vmatpush2.xpose.msra.mxu0 0.0
    %512 = vmatprep.subr.mxu0 0.0
    %513 = vmatpush2.xpose.msra.mxu0 0.0
    %514 = vmatprep.subr.mxu0 0.0
    %515 = vmatpush2.xpose.msra.mxu0 0.0
    %516 = vmatprep.subr.mxu0 0.0
    %517 = vmatpush2.xpose.msra.mxu0 0.0
    %518 = vmatprep.subr.mxu0 0.0
    %519 = vmatpush2.xpose.msra.mxu0 0.0
    %520 = vmatprep.subr.mxu0 0.0
    %521 = vmatpush2.xpose.msra.mxu0 0.0
    %522 = vmatprep.subr.mxu0 0.0
    %523 = vmatpush2.xpose.msra.mxu0 0.0
    %524 = vmatprep.mubr.f32.mxu0 %v46
    %525 = vmatmul.mubr.f32.gmra.mxu0 %v45
    %v526 = vpop.f32.mrf.mxu0
    %v527 = vadd.f32 %v457, %v526
    %v528 = vpop.f32.mrf.mxu0
    %529 = vdwg.mxu0
    %530 = vmatprep.subr.mxu0 %v304
    %531 = vmatpush1.xpose.msra.mxu0 %v303
    %532 = vmatprep.subr.mxu0 %v288
    %533 = vmatpush1.xpose.msra.mxu0 %v287
    %534 = vmatprep.subr.mxu0 %v272
    %535 = vmatpush1.xpose.msra.mxu0 %v271
    %536 = vmatprep.subr.mxu0 %v256
    %537 = vmatpush1.xpose.msra.mxu0 %v255
    %538 = vmatprep.subr.mxu0 %v240
    %539 = vmatpush1.xpose.msra.mxu0 %v239
    %540 = vmatprep.subr.mxu0 %v224
    %541 = vmatpush1.xpose.msra.mxu0 %v223
    %542 = vmatprep.subr.mxu0 %v208
    %543 = vmatpush1.xpose.msra.mxu0 %v207
    %544 = vmatprep.subr.mxu0 %v192
    %545 = vmatpush1.xpose.msra.mxu0 %v191
    %546 = vmatprep.subr.mxu0 %v176
    %547 = vmatpush1.xpose.msra.mxu0 %v175
    %548 = vmatprep.subr.mxu0 %v160
    %549 = vmatpush1.xpose.msra.mxu0 %v159
    %550 = vmatprep.subr.mxu0 %v144
    %551 = vmatpush1.xpose.msra.mxu0 %v143
    %552 = vmatprep.subr.mxu0 %v128
    %553 = vmatpush1.xpose.msra.mxu0 %v127
    %554 = vmatprep.subr.mxu0 %v112
    %555 = vmatpush1.xpose.msra.mxu0 %v111
    %556 = vmatprep.subr.mxu0 %v96
    %557 = vmatpush1.xpose.msra.mxu0 %v95
    %558 = vmatprep.subr.mxu0 %v80
    %559 = vmatpush1.xpose.msra.mxu0 %v79
    %560 = vmatprep.subr.mxu0 %v64
    %561 = vmatpush1.xpose.msra.mxu0 %v63
    %562 = vmatprep.subr.mxu0 0.0
    %563 = vmatpush2.xpose.msra.mxu0 0.0
    %564 = vmatprep.subr.mxu0 0.0
    %565 = vmatpush2.xpose.msra.mxu0 0.0
    %566 = vmatprep.subr.mxu0 0.0
    %567 = vmatpush2.xpose.msra.mxu0 0.0
    %568 = vmatprep.subr.mxu0 0.0
    %569 = vmatpush2.xpose.msra.mxu0 0.0
    %570 = vmatprep.subr.mxu0 0.0
    %571 = vmatpush2.xpose.msra.mxu0 0.0
    %572 = vmatprep.subr.mxu0 0.0
    %573 = vmatpush2.xpose.msra.mxu0 0.0
    %574 = vmatprep.subr.mxu0 0.0
    %575 = vmatpush2.xpose.msra.mxu0 0.0
    %576 = vmatprep.subr.mxu0 0.0
    %577 = vmatpush2.xpose.msra.mxu0 0.0
    %578 = vmatprep.subr.mxu0 0.0
    %579 = vmatpush2.xpose.msra.mxu0 0.0
    %580 = vmatprep.subr.mxu0 0.0
    %581 = vmatpush2.xpose.msra.mxu0 0.0
    %582 = vmatprep.subr.mxu0 0.0
    %583 = vmatpush2.xpose.msra.mxu0 0.0
    %584 = vmatprep.subr.mxu0 0.0
    %585 = vmatpush2.xpose.msra.mxu0 0.0
    %586 = vmatprep.subr.mxu0 0.0
    %587 = vmatpush2.xpose.msra.mxu0 0.0
    %588 = vmatprep.subr.mxu0 0.0
    %589 = vmatpush2.xpose.msra.mxu0 0.0
    %590 = vmatprep.subr.mxu0 0.0
    %591 = vmatpush2.xpose.msra.mxu0 0.0
    %592 = vmatprep.subr.mxu0 0.0
    %593 = vmatpush2.xpose.msra.mxu0 0.0
    %594 = vmatprep.mubr.f32.mxu0 %v48
    %595 = vmatmul.mubr.f32.gmra.mxu0 %v47
    %v596 = vpop.f32.mrf.mxu0
    %v597 = vadd.f32 %v527, %v596
    %v598 = vpop.f32.mrf.mxu0
    %599 = vdwg.mxu0
    %600 = vmatprep.subr.mxu0 %v306
    %601 = vmatpush1.xpose.msra.mxu0 %v305
    %602 = vmatprep.subr.mxu0 %v290
    %603 = vmatpush1.xpose.msra.mxu0 %v289
    %604 = vmatprep.subr.mxu0 %v274
    %605 = vmatpush1.xpose.msra.mxu0 %v273
    %606 = vmatprep.subr.mxu0 %v258
    %607 = vmatpush1.xpose.msra.mxu0 %v257
    %608 = vmatprep.subr.mxu0 %v242
    %609 = vmatpush1.xpose.msra.mxu0 %v241
    %610 = vmatprep.subr.mxu0 %v226
    %611 = vmatpush1.xpose.msra.mxu0 %v225
    %612 = vmatprep.subr.mxu0 %v210
    %613 = vmatpush1.xpose.msra.mxu0 %v209
    %614 = vmatprep.subr.mxu0 %v194
    %615 = vmatpush1.xpose.msra.mxu0 %v193
    %616 = vmatprep.subr.mxu0 %v178
    %617 = vmatpush1.xpose.msra.mxu0 %v177
    %618 = vmatprep.subr.mxu0 %v162
    %619 = vmatpush1.xpose.msra.mxu0 %v161
    %620 = vmatprep.subr.mxu0 %v146
    %621 = vmatpush1.xpose.msra.mxu0 %v145
    %622 = vmatprep.subr.mxu0 %v130
    %623 = vmatpush1.xpose.msra.mxu0 %v129
    %624 = vmatprep.subr.mxu0 %v114
    %625 = vmatpush1.xpose.msra.mxu0 %v113
    %626 = vmatprep.subr.mxu0 %v98
    %627 = vmatpush1.xpose.msra.mxu0 %v97
    %628 = vmatprep.subr.mxu0 %v82
    %629 = vmatpush1.xpose.msra.mxu0 %v81
    %630 = vmatprep.subr.mxu0 %v66
    %631 = vmatpush1.xpose.msra.mxu0 %v65
    %632 = vmatprep.subr.mxu0 0.0
    %633 = vmatpush2.xpose.msra.mxu0 0.0
    %634 = vmatprep.subr.mxu0 0.0
    %635 = vmatpush2.xpose.msra.mxu0 0.0
    %636 = vmatprep.subr.mxu0 0.0
    %637 = vmatpush2.xpose.msra.mxu0 0.0
    %638 = vmatprep.subr.mxu0 0.0
    %639 = vmatpush2.xpose.msra.mxu0 0.0
    %640 = vmatprep.subr.mxu0 0.0
    %641 = vmatpush2.xpose.msra.mxu0 0.0
    %642 = vmatprep.subr.mxu0 0.0
    %643 = vmatpush2.xpose.msra.mxu0 0.0
    %644 = vmatprep.subr.mxu0 0.0
    %645 = vmatpush2.xpose.msra.mxu0 0.0
    %646 = vmatprep.subr.mxu0 0.0
    %647 = vmatpush2.xpose.msra.mxu0 0.0
    %648 = vmatprep.subr.mxu0 0.0
    %649 = vmatpush2.xpose.msra.mxu0 0.0
    %650 = vmatprep.subr.mxu0 0.0
    %651 = vmatpush2.xpose.msra.mxu0 0.0
    %652 = vmatprep.subr.mxu0 0.0
    %653 = vmatpush2.xpose.msra.mxu0 0.0
    %654 = vmatprep.subr.mxu0 0.0
    %655 = vmatpush2.xpose.msra.mxu0 0.0
    %656 = vmatprep.subr.mxu0 0.0
    %657 = vmatpush2.xpose.msra.mxu0 0.0
    %658 = vmatprep.subr.mxu0 0.0
    %659 = vmatpush2.xpose.msra.mxu0 0.0
    %660 = vmatprep.subr.mxu0 0.0
    %661 = vmatpush2.xpose.msra.mxu0 0.0
    %662 = vmatprep.subr.mxu0 0.0
    %663 = vmatpush2.xpose.msra.mxu0 0.0
    %664 = vmatprep.mubr.f32.mxu0 %v50
    %665 = vmatmul.mubr.f32.gmra.mxu0 %v49
    %v666 = vpop.f32.mrf.mxu0
    %v667 = vadd.f32 %v597, %v666
    %v668 = vpop.f32.mrf.mxu0
    %669 = vdwg.mxu0
    %670 = vmatprep.subr.mxu0 %v308
    %671 = vmatpush1.xpose.msra.mxu0 %v307
    %672 = vmatprep.subr.mxu0 %v292
    %673 = vmatpush1.xpose.msra.mxu0 %v291
    %674 = vmatprep.subr.mxu0 %v276
    %675 = vmatpush1.xpose.msra.mxu0 %v275
    %676 = vmatprep.subr.mxu0 %v260
    %677 = vmatpush1.xpose.msra.mxu0 %v259
    %678 = vmatprep.subr.mxu0 %v244
    %679 = vmatpush1.xpose.msra.mxu0 %v243
    %680 = vmatprep.subr.mxu0 %v228
    %681 = vmatpush1.xpose.msra.mxu0 %v227
    %682 = vmatprep.subr.mxu0 %v212
    %683 = vmatpush1.xpose.msra.mxu0 %v211
    %684 = vmatprep.subr.mxu0 %v196
    %685 = vmatpush1.xpose.msra.mxu0 %v195
    %686 = vmatprep.subr.mxu0 %v180
    %687 = vmatpush1.xpose.msra.mxu0 %v179
    %688 = vmatprep.subr.mxu0 %v164
    %689 = vmatpush1.xpose.msra.mxu0 %v163
    %690 = vmatprep.subr.mxu0 %v148
    %691 = vmatpush1.xpose.msra.mxu0 %v147
    %692 = vmatprep.subr.mxu0 %v132
    %693 = vmatpush1.xpose.msra.mxu0 %v131
    %694 = vmatprep.subr.mxu0 %v116
    %695 = vmatpush1.xpose.msra.mxu0 %v115
    %696 = vmatprep.subr.mxu0 %v100
    %697 = vmatpush1.xpose.msra.mxu0 %v99
    %698 = vmatprep.subr.mxu0 %v84
    %699 = vmatpush1.xpose.msra.mxu0 %v83
    %700 = vmatprep.subr.mxu0 %v68
    %701 = vmatpush1.xpose.msra.mxu0 %v67
    %702 = vmatprep.subr.mxu0 0.0
    %703 = vmatpush2.xpose.msra.mxu0 0.0
    %704 = vmatprep.subr.mxu0 0.0
    %705 = vmatpush2.xpose.msra.mxu0 0.0
    %706 = vmatprep.subr.mxu0 0.0
    %707 = vmatpush2.xpose.msra.mxu0 0.0
    %708 = vmatprep.subr.mxu0 0.0
    %709 = vmatpush2.xpose.msra.mxu0 0.0
    %710 = vmatprep.subr.mxu0 0.0
    %711 = vmatpush2.xpose.msra.mxu0 0.0
    %712 = vmatprep.subr.mxu0 0.0
    %713 = vmatpush2.xpose.msra.mxu0 0.0
    %714 = vmatprep.subr.mxu0 0.0
    %715 = vmatpush2.xpose.msra.mxu0 0.0
    %716 = vmatprep.subr.mxu0 0.0
    %717 = vmatpush2.xpose.msra.mxu0 0.0
    %718 = vmatprep.subr.mxu0 0.0
    %719 = vmatpush2.xpose.msra.mxu0 0.0
    %720 = vmatprep.subr.mxu0 0.0
    %721 = vmatpush2.xpose.msra.mxu0 0.0
    %722 = vmatprep.subr.mxu0 0.0
    %723 = vmatpush2.xpose.msra.mxu0 0.0
    %724 = vmatprep.subr.mxu0 0.0
    %725 = vmatpush2.xpose.msra.mxu0 0.0
    %726 = vmatprep.subr.mxu0 0.0
    %727 = vmatpush2.xpose.msra.mxu0 0.0
    %728 = vmatprep.subr.mxu0 0.0
    %729 = vmatpush2.xpose.msra.mxu0 0.0
    %730 = vmatprep.subr.mxu0 0.0
    %731 = vmatpush2.xpose.msra.mxu0 0.0
    %732 = vmatprep.subr.mxu0 0.0
    %733 = vmatpush2.xpose.msra.mxu0 0.0
    %734 = vmatprep.mubr.f32.mxu0 %v52
    %735 = vmatmul.mubr.f32.gmra.mxu0 %v51
    %v736 = vpop.f32.mrf.mxu0
    %v737 = vadd.f32 %v667, %v736
    %v738 = vpop.f32.mrf.mxu0
    %739 = vdwg.mxu0
    %740 = vmatprep.subr.mxu0 %v310
    %741 = vmatpush1.xpose.msra.mxu0 %v309
    %742 = vmatprep.subr.mxu0 %v294
    %743 = vmatpush1.xpose.msra.mxu0 %v293
    %744 = vmatprep.subr.mxu0 %v278
    %745 = vmatpush1.xpose.msra.mxu0 %v277
    %746 = vmatprep.subr.mxu0 %v262
    %747 = vmatpush1.xpose.msra.mxu0 %v261
    %748 = vmatprep.subr.mxu0 %v246
    %749 = vmatpush1.xpose.msra.mxu0 %v245
    %750 = vmatprep.subr.mxu0 %v230
    %751 = vmatpush1.xpose.msra.mxu0 %v229
    %752 = vmatprep.subr.mxu0 %v214
    %753 = vmatpush1.xpose.msra.mxu0 %v213
    %754 = vmatprep.subr.mxu0 %v198
    %755 = vmatpush1.xpose.msra.mxu0 %v197
    %756 = vmatprep.subr.mxu0 %v182
    %757 = vmatpush1.xpose.msra.mxu0 %v181
    %758 = vmatprep.subr.mxu0 %v166
    %759 = vmatpush1.xpose.msra.mxu0 %v165
    %760 = vmatprep.subr.mxu0 %v150
    %761 = vmatpush1.xpose.msra.mxu0 %v149
    %762 = vmatprep.subr.mxu0 %v134
    %763 = vmatpush1.xpose.msra.mxu0 %v133
    %764 = vmatprep.subr.mxu0 %v118
    %765 = vmatpush1.xpose.msra.mxu0 %v117
    %766 = vmatprep.subr.mxu0 %v102
    %767 = vmatpush1.xpose.msra.mxu0 %v101
    %768 = vmatprep.subr.mxu0 %v86
    %769 = vmatpush1.xpose.msra.mxu0 %v85
    %770 = vmatprep.subr.mxu0 %v70
    %771 = vmatpush1.xpose.msra.mxu0 %v69
    %772 = vmatprep.subr.mxu0 0.0
    %773 = vmatpush2.xpose.msra.mxu0 0.0
    %774 = vmatprep.subr.mxu0 0.0
    %775 = vmatpush2.xpose.msra.mxu0 0.0
    %776 = vmatprep.subr.mxu0 0.0
    %777 = vmatpush2.xpose.msra.mxu0 0.0
    %778 = vmatprep.subr.mxu0 0.0
    %779 = vmatpush2.xpose.msra.mxu0 0.0
    %780 = vmatprep.subr.mxu0 0.0
    %781 = vmatpush2.xpose.msra.mxu0 0.0
    %782 = vmatprep.subr.mxu0 0.0
    %783 = vmatpush2.xpose.msra.mxu0 0.0
    %784 = vmatprep.subr.mxu0 0.0
    %785 = vmatpush2.xpose.msra.mxu0 0.0
    %786 = vmatprep.subr.mxu0 0.0
    %787 = vmatpush2.xpose.msra.mxu0 0.0
    %788 = vmatprep.subr.mxu0 0.0
    %789 = vmatpush2.xpose.msra.mxu0 0.0
    %790 = vmatprep.subr.mxu0 0.0
    %791 = vmatpush2.xpose.msra.mxu0 0.0
    %792 = vmatprep.subr.mxu0 0.0
    %793 = vmatpush2.xpose.msra.mxu0 0.0
    %794 = vmatprep.subr.mxu0 0.0
    %795 = vmatpush2.xpose.msra.mxu0 0.0
    %796 = vmatprep.subr.mxu0 0.0
    %797 = vmatpush2.xpose.msra.mxu0 0.0
    %798 = vmatprep.subr.mxu0 0.0
    %799 = vmatpush2.xpose.msra.mxu0 0.0
    %800 = vmatprep.subr.mxu0 0.0
    %801 = vmatpush2.xpose.msra.mxu0 0.0
    %802 = vmatprep.subr.mxu0 0.0
    %803 = vmatpush2.xpose.msra.mxu0 0.0
    %804 = vmatprep.mubr.f32.mxu0 %v54
    %805 = vmatmul.mubr.f32.gmra.mxu0 %v53
    %v806 = vpop.f32.mrf.mxu0
    %v807 = vadd.f32 %v737, %v806
    %v808 = vpop.f32.mrf.mxu0
    %809 = vdwg.mxu0
    %810 = vmatprep.subr.mxu0 %v312
    %811 = vmatpush1.xpose.msra.mxu0 %v311
    %812 = vmatprep.subr.mxu0 %v296
    %813 = vmatpush1.xpose.msra.mxu0 %v295
    %814 = vmatprep.subr.mxu0 %v280
    %815 = vmatpush1.xpose.msra.mxu0 %v279
    %816 = vmatprep.subr.mxu0 %v264
    %817 = vmatpush1.xpose.msra.mxu0 %v263
    %818 = vmatprep.subr.mxu0 %v248
    %819 = vmatpush1.xpose.msra.mxu0 %v247
    %820 = vmatprep.subr.mxu0 %v232
    %821 = vmatpush1.xpose.msra.mxu0 %v231
    %822 = vmatprep.subr.mxu0 %v216
    %823 = vmatpush1.xpose.msra.mxu0 %v215
    %824 = vmatprep.subr.mxu0 %v200
    %825 = vmatpush1.xpose.msra.mxu0 %v199
    %826 = vmatprep.subr.mxu0 %v184
    %827 = vmatpush1.xpose.msra.mxu0 %v183
    %828 = vmatprep.subr.mxu0 %v168
    %829 = vmatpush1.xpose.msra.mxu0 %v167
    %830 = vmatprep.subr.mxu0 %v152
    %831 = vmatpush1.xpose.msra.mxu0 %v151
    %832 = vmatprep.subr.mxu0 %v136
    %833 = vmatpush1.xpose.msra.mxu0 %v135
    %834 = vmatprep.subr.mxu0 %v120
    %835 = vmatpush1.xpose.msra.mxu0 %v119
    %836 = vmatprep.subr.mxu0 %v104
    %837 = vmatpush1.xpose.msra.mxu0 %v103
    %838 = vmatprep.subr.mxu0 %v88
    %839 = vmatpush1.xpose.msra.mxu0 %v87
    %840 = vmatprep.subr.mxu0 %v72
    %841 = vmatpush1.xpose.msra.mxu0 %v71
    %842 = vmatprep.subr.mxu0 0.0
    %843 = vmatpush2.xpose.msra.mxu0 0.0
    %844 = vmatprep.subr.mxu0 0.0
    %845 = vmatpush2.xpose.msra.mxu0 0.0
    %846 = vmatprep.subr.mxu0 0.0
    %847 = vmatpush2.xpose.msra.mxu0 0.0
    %848 = vmatprep.subr.mxu0 0.0
    %849 = vmatpush2.xpose.msra.mxu0 0.0
    %850 = vmatprep.subr.mxu0 0.0
    %851 = vmatpush2.xpose.msra.mxu0 0.0
    %852 = vmatprep.subr.mxu0 0.0
    %853 = vmatpush2.xpose.msra.mxu0 0.0
    %854 = vmatprep.subr.mxu0 0.0
    %855 = vmatpush2.xpose.msra.mxu0 0.0
    %856 = vmatprep.subr.mxu0 0.0
    %857 = vmatpush2.xpose.msra.mxu0 0.0
    %858 = vmatprep.subr.mxu0 0.0
    %859 = vmatpush2.xpose.msra.mxu0 0.0
    %860 = vmatprep.subr.mxu0 0.0
    %861 = vmatpush2.xpose.msra.mxu0 0.0
    %862 = vmatprep.subr.mxu0 0.0
    %863 = vmatpush2.xpose.msra.mxu0 0.0
    %864 = vmatprep.subr.mxu0 0.0
    %865 = vmatpush2.xpose.msra.mxu0 0.0
    %866 = vmatprep.subr.mxu0 0.0
    %867 = vmatpush2.xpose.msra.mxu0 0.0
    %868 = vmatprep.subr.mxu0 0.0
    %869 = vmatpush2.xpose.msra.mxu0 0.0
    %870 = vmatprep.subr.mxu0 0.0
    %871 = vmatpush2.xpose.msra.mxu0 0.0
    %872 = vmatprep.subr.mxu0 0.0
    %873 = vmatpush2.xpose.msra.mxu0 0.0
    %874 = vmatprep.mubr.f32.mxu0 %v56
    %875 = vmatmul.mubr.f32.gmra.mxu0 %v55
    %v876 = vpop.f32.mrf.mxu0
    %v877 = vadd.f32 %v807, %v876
    %v878 = vpop.f32.mrf.mxu0
    %879 = vdwg.mxu0
    %v880 = vxor.u32 %v877, 2147483648
    %v881 = vmul.f32 %v880, 1.442695
    %v882 = vpow.pop %v881
    %v883 = vadd.f32 %v882, 1.0
    %v884 = vrcp.pop %v883
    %v885 = vmul.f32 1.0, %v884
    %886 = vst [vmem:[#allocation7] sm:$0xff] %v885
    // Predicated region
    $region22: #{tpu_custom_call.1} parent=1 // pred_check
      _
    $region23: #{tpu_custom_call.1} parent=1 // pred_check_branch
      %888 = sbr.rel (0) target = $region25
    $region24: #{tpu_custom_call.1} parent=1 // pred_region
      %s890 = ssub.s32 128, 128
      %891 = vsyncadd [#allocation4], %s890
      %s893 = sshll.u32 [#allocation7], 4
      %s894 = int_to_ptr.vmem [resolvable:$true] %s893
      %896 = dma.vmem_to_hbm [thread:$0]  %s894, 128, %s3, [#allocation4]
    $region25: #{tpu_custom_call.1} parent=1 // pred_fallthru
      _
    // Predicated region
    $region26: #{tpu_custom_call.1} parent=1 // pred_check
      _
    $region27: #{tpu_custom_call.1} parent=1 // pred_check_branch
      %898 = sbr.rel (0) target = $region29
    $region28: #{tpu_custom_call.1} parent=1 // pred_region
      %899 = dma.done [#allocation4], 128
    $region29: #{tpu_custom_call.1} parent=1 // pred_fallthru
      _
    %900 = vsyncpa [#allocation3], 1
    %901 = vsyncpa [#allocation6], 1
    %902 = vsyncpa [#allocation4], 1

</llo_original>
